<compile_context>
chip_gen: v6e
topology: v6e:2x2x1
jax: 0.10.0
libtpu: 0.0.40
codegen_flags: <defaults>
</compile_context>

<pallas_src>
import jax
import jax.numpy as jnp
from jax import lax
from jax.experimental import pallas as pl
from jax.experimental.pallas import tpu as pltpu


# ----------------------------- model config ---------------------------------
NUM_USERS = 50
NUM_ITEMS = 100
USER_FEATURE_DIM = 16
ITEM_FEATURE_DIM = 16
EMBEDDING_DIMS = 32
HIDDEN_DIMS = [64, 32]          # fixed (trial=None path in the PyTorch module)
BATCH = 8


def _round_up(x, m):
    return (x + m - 1) // m * m


E = EMBEDDING_DIMS
E2 = 2 * E                       # 64
E4 = 4 * E                       # 128
FU, FI = USER_FEATURE_DIM, ITEM_FEATURE_DIM
H0, H1 = HIDDEN_DIMS

# padded embedding-table row counts (sublane-aligned); table slab = [user ; item]
U_ROWS = _round_up(NUM_USERS + 1, 8)     # 56
I_ROWS = _round_up(NUM_ITEMS + 1, 8)     # 104

# weight slab: row-stacked blocks, each padded to W_COLS lanes
R_W1 = 0                         # (FU+FI, 4E)  block-diag user/item feature layer 1
R_W2 = R_W1 + FU + FI            # (4E, 2E)     block-diag user/item feature layer 2
R_M0U = R_W2 + E4                # (2E, H0)     mlp layer-0, user-embedding K-block
R_M0I = R_M0U + E2               # (2E, H0)     mlp layer-0, item-embedding K-block
R_M0F = R_M0I + E2               # (2E, H0)     mlp layer-0, [uft|ift] K-block
R_M1 = R_M0F + E2                # (H0, H1)
R_MF = R_M1 + H0                 # (H1, E)
W_ROWS = R_MF + H1
W_COLS = _round_up(max(E4, E2, H0, H1, E), 128)   # 128

# bias / prediction-vector slab rows (8, W_COLS)
B_ROW_B1, B_ROW_B2, B_ROW_BM0, B_ROW_BM1, B_ROW_BMF, B_ROW_WP_MLP, B_ROW_WP_MF, B_ROW_BP = range(8)


# ------------------------------- kernel -------------------------------------
def ncf_kernel(ids_ref, feats_ref, emb_ref, w_ref, b_ref, out_ref):
    f32 = jnp.float32
    tb = ids_ref.shape[0]

    ids = ids_ref[...]                      # (tb, 2) int32
    uid = ids[:, 0:1]
    iid = ids[:, 1:2]

    # --- fused embedding gather: one-hot @ table on the MXU (exact for f32) ---
    u_hot = (lax.broadcasted_iota(jnp.int32, (tb, U_ROWS), 1) == uid).astype(f32)
    i_hot = (lax.broadcasted_iota(jnp.int32, (tb, I_ROWS), 1) == iid).astype(f32)
    user_emb = jnp.dot(u_hot, emb_ref[0:U_ROWS, :],
                       preferred_element_type=f32)            # (tb, 2E) = [ue_mlp | ue_mf]
    item_emb = jnp.dot(i_hot, emb_ref[U_ROWS:U_ROWS + I_ROWS, :],
                       preferred_element_type=f32)            # (tb, 2E) = [ie_mlp | ie_mf]

    # --- merged user/item feature transforms (block-diagonal weights) ---
    x = feats_ref[...]                                        # (tb, FU+FI) = [uf | itf]
    h = jnp.dot(x, w_ref[R_W1:R_W1 + FU + FI, 0:E4], preferred_element_type=f32)
    h = jnp.maximum(h + b_ref[B_ROW_B1:B_ROW_B1 + 1, 0:E4], 0.0)
    feat = (jnp.dot(h, w_ref[R_W2:R_W2 + E4, 0:E2], preferred_element_type=f32)
            + b_ref[B_ROW_B2:B_ROW_B2 + 1, 0:E2])             # (tb, 2E) = [uft | ift]

    # --- MLP layer 0: concat-free K-split over {user_emb, item_emb, feat} ---
    h0 = (jnp.dot(user_emb, w_ref[R_M0U:R_M0U + E2, 0:H0], preferred_element_type=f32)
          + jnp.dot(item_emb, w_ref[R_M0I:R_M0I + E2, 0:H0], preferred_element_type=f32)
          + jnp.dot(feat, w_ref[R_M0F:R_M0F + E2, 0:H0], preferred_element_type=f32)
          + b_ref[B_ROW_BM0:B_ROW_BM0 + 1, 0:H0])
    h0 = jnp.maximum(h0, 0.0)
    # TODO(synk): nn.Dropout layers are identity here (inference semantics).

    h1 = jnp.maximum(
        jnp.dot(h0, w_ref[R_M1:R_M1 + H0, 0:H1], preferred_element_type=f32)
        + b_ref[B_ROW_BM1:B_ROW_BM1 + 1, 0:H1], 0.0)
    mlp_out = jnp.maximum(
        jnp.dot(h1, w_ref[R_MF:R_MF + H1, 0:E], preferred_element_type=f32)
        + b_ref[B_ROW_BMF:B_ROW_BMF + 1, 0:E], 0.0)           # (tb, E)

    # --- prediction head on the VPU (multiply + lane reduce), concat-free ---
    # mf branch: ue_mf * ie_mf is lanes E:2E of user_emb*item_emb; the wp_mf row
    # has zeros in lanes 0:E so the mlp-embedding product contributes nothing.
    mlp_contrib = jnp.sum(mlp_out * b_ref[B_ROW_WP_MLP:B_ROW_WP_MLP + 1, 0:E],
                          axis=-1, keepdims=True)
    mf_contrib = jnp.sum(user_emb * item_emb * b_ref[B_ROW_WP_MF:B_ROW_WP_MF + 1, 0:E2],
                         axis=-1, keepdims=True)
    logits = mlp_contrib + mf_contrib + b_ref[B_ROW_BP:B_ROW_BP + 1, 0:1]
    out_ref[...] = jax.nn.sigmoid(logits)


# --------------------------- parameter packing --------------------------------
def pack_params(p):
    """Pack per-layer params into 3 VMEM slabs: embeddings, weights, biases/vectors."""
    f32 = jnp.float32

    # --- embedding slab: [user_mlp|user_mf] rows, then [item_mlp|item_mf] rows ---
    u_tbl = jnp.concatenate([p["user_embedding_mlp"], p["user_embedding_mf"]], axis=1)
    i_tbl = jnp.concatenate([p["item_embedding_mlp"], p["item_embedding_mf"]], axis=1)
    u_tbl = jnp.pad(u_tbl, ((0, U_ROWS - u_tbl.shape[0]), (0, 0)))
    i_tbl = jnp.pad(i_tbl, ((0, I_ROWS - i_tbl.shape[0]), (0, 0)))
    emb_slab = jnp.concatenate([u_tbl, i_tbl], axis=0).astype(f32)   # (U_ROWS+I_ROWS, 2E)

    # --- weight slab ---
    def blockdiag(a, b):
        ra, ca = a.shape
        rb, cb = b.shape
        top = jnp.concatenate([a, jnp.zeros((ra, cb), f32)], axis=1)
        bot = jnp.concatenate([jnp.zeros((rb, ca), f32), b], axis=1)
        return jnp.concatenate([top, bot], axis=0)

    w1_bd = blockdiag(p["w_uf1"], p["w_if1"])       # (FU+FI, 4E)
    w2_bd = blockdiag(p["w_uf2"], p["w_if2"])       # (4E, 2E)

    zero_e = jnp.zeros((E, H0), f32)
    # original w_m0 row order: [ue_mlp(0:E) | uft(E:2E) | ie_mlp(2E:3E) | ift(3E:4E)]
    wm0_u = jnp.concatenate([p["w_m0"][0:E], zero_e], axis=0)                  # acts on [ue_mlp|ue_mf]
    wm0_i = jnp.concatenate([p["w_m0"][2 * E:3 * E], zero_e], axis=0)          # acts on [ie_mlp|ie_mf]
    wm0_f = jnp.concatenate([p["w_m0"][E:2 * E], p["w_m0"][3 * E:4 * E]], axis=0)  # acts on [uft|ift]

    def pad_cols(w):
        return jnp.pad(w, ((0, 0), (0, W_COLS - w.shape[1])))

    w_slab = jnp.concatenate(
        [pad_cols(w1_bd), pad_cols(w2_bd), pad_cols(wm0_u), pad_cols(wm0_i),
         pad_cols(wm0_f), pad_cols(p["w_m1"]), pad_cols(p["w_mf"])],
        axis=0).astype(f32)                                           # (W_ROWS, W_COLS)
    assert w_slab.shape == (W_ROWS, W_COLS)

    # --- bias / prediction-vector slab (8, W_COLS) ---
    def row(v):
        v = v.reshape(-1)
        return jnp.pad(v, (0, W_COLS - v.shape[0]))[None, :]

    wp = p["w_p"].reshape(-1)                                        # (2E,)
    b_slab = jnp.concatenate([
        row(jnp.concatenate([p["b_uf1"].reshape(-1), p["b_if1"].reshape(-1)])),
        row(jnp.concatenate([p["b_uf2"].reshape(-1), p["b_if2"].reshape(-1)])),
        row(p["b_m0"]),
        row(p["b_m1"]),
        row(p["b_mf"]),
        row(wp[0:E]),                                                 # prediction weights, mlp half
        row(jnp.concatenate([jnp.zeros((E,), f32), wp[E:2 * E]])),    # prediction weights, mf half
        row(p["b_p"]),
    ], axis=0).astype(f32)                                            # (8, W_COLS)

    return emb_slab, w_slab, b_slab


# ------------------------------ wrapper --------------------------------------
def ncf_forward(packed, user_ids, item_ids, user_features, item_features):
    emb_slab, w_slab, b_slab = packed
    b = user_ids.shape[0]

    ids = jnp.stack([user_ids, item_ids], axis=1).astype(jnp.int32)           # (B, 2)
    feats = jnp.concatenate([user_features, item_features], axis=1).astype(jnp.float32)
    n_feat = feats.shape[1]

    tb = min(b, 256)                    # batch tile (multiple of 8 assumed)
    assert b % tb == 0 and tb % 8 == 0
    grid = (b // tb,)

    out = pl.pallas_call(
        ncf_kernel,
        out_shape=jax.ShapeDtypeStruct((b, 1), jnp.float32),
        grid_spec=pltpu.PrefetchScalarGridSpec(
            num_scalar_prefetch=0,
            grid=grid,
            in_specs=[
                pl.BlockSpec((tb, 2), lambda i: (i, 0)),
                pl.BlockSpec((tb, n_feat), lambda i: (i, 0)),
                pl.BlockSpec(emb_slab.shape, lambda i: (0, 0)),   # VMEM-resident across grid
                pl.BlockSpec(w_slab.shape, lambda i: (0, 0)),
                pl.BlockSpec(b_slab.shape, lambda i: (0, 0)),
            ],
            out_specs=pl.BlockSpec((tb, 1), lambda i: (i, 0)),
        ),
        compiler_params=pltpu.CompilerParams(
            dimension_semantics=("parallel",)),
    )(ids, feats, emb_slab, w_slab, b_slab)
    return out.reshape(-1)              # .flatten() in the PyTorch module


# --------------------------- parameter init ----------------------------------
def init_params(key):
    keys = iter(jax.random.split(key, 64))

    def emb(n, d):
        # nn.init.normal_(weight, mean=0, std=0.01)
        return 0.01 * jax.random.normal(next(keys), (n, d), dtype=jnp.float32)

    def linear(fan_in, fan_out, bias_fill=None):
        # kaiming-uniform-style bound; weight stored pre-transposed as (in, out)
        bound = (6.0 / fan_in) ** 0.5
        w = jax.random.uniform(next(keys), (fan_in, fan_out), dtype=jnp.float32,
                               minval=-bound, maxval=bound)
        if bias_fill is None:
            b_bound = 1.0 / (fan_in ** 0.5)
            b = jax.random.uniform(next(keys), (1, fan_out), dtype=jnp.float32,
                                   minval=-b_bound, maxval=b_bound)
        else:
            b = jnp.full((1, fan_out), bias_fill, dtype=jnp.float32)
        return w, b

    p = {}
    p["user_embedding_mlp"] = emb(NUM_USERS + 1, E)
    p["item_embedding_mlp"] = emb(NUM_ITEMS + 1, E)
    p["user_embedding_mf"] = emb(NUM_USERS + 1, E)
    p["item_embedding_mf"] = emb(NUM_ITEMS + 1, E)

    p["w_uf1"], p["b_uf1"] = linear(USER_FEATURE_DIM, 2 * E)
    p["w_uf2"], p["b_uf2"] = linear(2 * E, E)
    p["w_if1"], p["b_if1"] = linear(ITEM_FEATURE_DIM, 2 * E)
    p["w_if2"], p["b_if2"] = linear(2 * E, E)

    p["w_m0"], p["b_m0"] = linear(4 * E, HIDDEN_DIMS[0], bias_fill=0.01)
    p["w_m1"], p["b_m1"] = linear(HIDDEN_DIMS[0], HIDDEN_DIMS[1], bias_fill=0.01)
    p["w_mf"], p["b_mf"] = linear(HIDDEN_DIMS[1], E, bias_fill=0.01)

    # prediction layer: xavier_uniform (gain for sigmoid = 1.0)
    fan_in, fan_out = 2 * E, 1
    bound = (6.0 / (fan_in + fan_out)) ** 0.5
    p["w_p"] = jax.random.uniform(next(keys), (fan_in, fan_out), dtype=jnp.float32,
                                  minval=-bound, maxval=bound)
    p["b_p"] = jnp.zeros((1, fan_out), dtype=jnp.float32)
    return p


# ---------------------------- pure-JAX reference -----------------------------
def ncf_reference(params, user_ids, item_ids, user_features, item_features):
    def lin(x, w, b):
        return x @ w + b

    ue_mlp = params["user_embedding_mlp"][user_ids]
    ie_mlp = params["item_embedding_mlp"][item_ids]
    ue_mf = params["user_embedding_mf"][user_ids]
    ie_mf = params["item_embedding_mf"][item_ids]

    uft = lin(jnp.maximum(lin(user_features, params["w_uf1"], params["b_uf1"]), 0.0),
              params["w_uf2"], params["b_uf2"])
    ift = lin(jnp.maximum(lin(item_features, params["w_if1"], params["b_if1"]), 0.0),
              params["w_if2"], params["b_if2"])

    mlp_in = jnp.concatenate([ue_mlp, uft, ie_mlp, ift], axis=-1)
    h = jnp.maximum(lin(mlp_in, params["w_m0"], params["b_m0"]), 0.0)
    h = jnp.maximum(lin(h, params["w_m1"], params["b_m1"]), 0.0)
    mlp_out = jnp.maximum(lin(h, params["w_mf"], params["b_mf"]), 0.0)

    mf_out = ue_mf * ie_mf
    final_in = jnp.concatenate([mlp_out, mf_out], axis=-1)
    logits = lin(final_in, params["w_p"], params["b_p"])
    return jax.nn.sigmoid(logits).reshape(-1)


# --------------------------------- main ---------------------------------------
if __name__ == "__main__":
    key = jax.random.PRNGKey(0)
    k_param, k_uid, k_iid, k_uf, k_if = jax.random.split(key, 5)

    params = init_params(k_param)
    packed = pack_params(params)

    user_ids = jax.random.randint(k_uid, (BATCH,), 0, NUM_USERS + 1)
    item_ids = jax.random.randint(k_iid, (BATCH,), 0, NUM_ITEMS + 1)
    user_features = jax.random.normal(k_uf, (BATCH, USER_FEATURE_DIM), jnp.float32)
    item_features = jax.random.normal(k_if, (BATCH, ITEM_FEATURE_DIM), jnp.float32)

    out = ncf_forward(packed, user_ids, item_ids, user_features, item_features)
    out = jax.block_until_ready(out)

    ref = ncf_reference(params, user_ids, item_ids, user_features, item_features)
    assert out.shape == (BATCH,)
    assert jnp.allclose(out, ref, atol=3e-5, rtol=3e-5), (out, ref)

    print("KERNEL_OK")
</pallas_src>

<mosaic_0001>
module attributes {stable_mosaic.version = 11 : i64} {
  func.func @ncf_kernel(%arg0: i32, %arg1: memref<8x2xi32, #tpu.memory_space<vmem>>, %arg2: memref<8x32xf32, #tpu.memory_space<vmem>>, %arg3: memref<160x64xf32, #tpu.memory_space<vmem>>, %arg4: memref<448x128xf32, #tpu.memory_space<vmem>>, %arg5: memref<8x128xf32, #tpu.memory_space<vmem>>, %arg6: memref<8x1xf32, #tpu.memory_space<vmem>>) attributes {dimension_semantics = [#tpu.dimension_semantics<parallel>], iteration_bounds = array<i64: 1>, scalar_prefetch = 0 : i64, scratch_operands = 0 : i64, tpu.core_type = #tpu.core_type<tc>, window_params = [{transform_indices = @transform_0, window_bounds = array<i64: 8, 2>}, {transform_indices = @transform_1, window_bounds = array<i64: 8, 32>}, {pipeline_mode = #tpu.pipeline_mode<synchronous>, transform_indices = @transform_2, window_bounds = array<i64: 160, 64>}, {pipeline_mode = #tpu.pipeline_mode<synchronous>, transform_indices = @transform_3, window_bounds = array<i64: 448, 128>}, {pipeline_mode = #tpu.pipeline_mode<synchronous>, transform_indices = @transform_4, window_bounds = array<i64: 8, 128>}, {transform_indices = @transform_5, window_bounds = array<i64: 8, 1>}]} {
    %c0 = arith.constant 0 : index
    %c0_0 = arith.constant 0 : index
    %0 = vector.load %arg1[%c0, %c0_0] : memref<8x2xi32, #tpu.memory_space<vmem>>, vector<8x2xi32>
    %1 = vector.extract_strided_slice %0 {offsets = [0, 0], sizes = [8, 1], strides = [1, 1]} : vector<8x2xi32> to vector<8x1xi32>
    %2 = vector.extract_strided_slice %0 {offsets = [0, 1], sizes = [8, 1], strides = [1, 1]} : vector<8x2xi32> to vector<8x1xi32>
    %3 = tpu.iota {dimensions = array<i32: 1>} : vector<8x56xi32>
    %4 = vector.broadcast %1 : vector<8x1xi32> to vector<8x56xi32>
    %5 = arith.cmpi eq, %3, %4 : vector<8x56xi32>
    %6 = arith.extui %5 : vector<8x56xi1> to vector<8x56xi32>
    %7 = arith.sitofp %6 : vector<8x56xi32> to vector<8x56xf32>
    %8 = tpu.iota {dimensions = array<i32: 1>} : vector<8x104xi32>
    %9 = vector.broadcast %2 : vector<8x1xi32> to vector<8x104xi32>
    %10 = arith.cmpi eq, %8, %9 : vector<8x104xi32>
    %11 = arith.extui %10 : vector<8x104xi1> to vector<8x104xi32>
    %12 = arith.sitofp %11 : vector<8x104xi32> to vector<8x104xf32>
    %c0_1 = arith.constant 0 : index
    %c0_2 = arith.constant 0 : index
    %13 = vector.load %arg3[%c0_1, %c0_2] : memref<160x64xf32, #tpu.memory_space<vmem>>, vector<56x64xf32>
    %cst = arith.constant dense<0.000000e+00> : vector<8x64xf32>
    %14 = tpu.matmul %7, %13, %cst {dimension_numbers = #tpu.dot_dimension_numbers<[1], [0], [0], [1], [0, 0, 1, 1], [], []>} : vector<8x56xf32>, vector<56x64xf32>, vector<8x64xf32> -> vector<8x64xf32>
    %c56 = arith.constant 56 : index
    %c0_3 = arith.constant 0 : index
    %15 = vector.load %arg3[%c56, %c0_3] : memref<160x64xf32, #tpu.memory_space<vmem>>, vector<104x64xf32>
    %cst_4 = arith.constant dense<0.000000e+00> : vector<8x64xf32>
    %16 = tpu.matmul %12, %15, %cst_4 {dimension_numbers = #tpu.dot_dimension_numbers<[1], [0], [0], [1], [0, 0, 1, 1], [], []>} : vector<8x104xf32>, vector<104x64xf32>, vector<8x64xf32> -> vector<8x64xf32>
    %c0_5 = arith.constant 0 : index
    %c0_6 = arith.constant 0 : index
    %17 = vector.load %arg2[%c0_5, %c0_6] : memref<8x32xf32, #tpu.memory_space<vmem>>, vector<8x32xf32>
    %c0_7 = arith.constant 0 : index
    %c0_8 = arith.constant 0 : index
    %18 = vector.load %arg4[%c0_7, %c0_8] : memref<448x128xf32, #tpu.memory_space<vmem>>, vector<32x128xf32>
    %cst_9 = arith.constant dense<0.000000e+00> : vector<8x128xf32>
    %19 = tpu.matmul %17, %18, %cst_9 {dimension_numbers = #tpu.dot_dimension_numbers<[1], [0], [0], [1], [0, 0, 1, 1], [], []>} : vector<8x32xf32>, vector<32x128xf32>, vector<8x128xf32> -> vector<8x128xf32>
    %c0_10 = arith.constant 0 : index
    %c0_11 = arith.constant 0 : index
    %20 = vector.load %arg5[%c0_10, %c0_11] : memref<8x128xf32, #tpu.memory_space<vmem>>, vector<1x128xf32>
    %21 = vector.broadcast %20 : vector<1x128xf32> to vector<8x128xf32>
    %22 = arith.addf %19, %21 : vector<8x128xf32>
    %cst_12 = arith.constant 0.000000e+00 : f32
    %23 = vector.broadcast %cst_12 : f32 to vector<8x128xf32>
    %24 = arith.maximumf %22, %23 : vector<8x128xf32>
    %c32 = arith.constant 32 : index
    %c0_13 = arith.constant 0 : index
    %25 = vector.load %arg4[%c32, %c0_13] : memref<448x128xf32, #tpu.memory_space<vmem>>, vector<128x64xf32>
    %cst_14 = arith.constant dense<0.000000e+00> : vector<8x64xf32>
    %26 = tpu.matmul %24, %25, %cst_14 {dimension_numbers = #tpu.dot_dimension_numbers<[1], [0], [0], [1], [0, 0, 1, 1], [], []>} : vector<8x128xf32>, vector<128x64xf32>, vector<8x64xf32> -> vector<8x64xf32>
    %c1 = arith.constant 1 : index
    %c0_15 = arith.constant 0 : index
    %27 = vector.load %arg5[%c1, %c0_15] : memref<8x128xf32, #tpu.memory_space<vmem>>, vector<1x64xf32>
    %28 = vector.broadcast %27 : vector<1x64xf32> to vector<8x64xf32>
    %29 = arith.addf %26, %28 : vector<8x64xf32>
    %c160 = arith.constant 160 : index
    %c0_16 = arith.constant 0 : index
    %30 = vector.load %arg4[%c160, %c0_16] : memref<448x128xf32, #tpu.memory_space<vmem>>, vector<64x64xf32>
    %cst_17 = arith.constant dense<0.000000e+00> : vector<8x64xf32>
    %31 = tpu.matmul %14, %30, %cst_17 {dimension_numbers = #tpu.dot_dimension_numbers<[1], [0], [0], [1], [0, 0, 1, 1], [], []>} : vector<8x64xf32>, vector<64x64xf32>, vector<8x64xf32> -> vector<8x64xf32>
    %c224 = arith.constant 224 : index
    %c0_18 = arith.constant 0 : index
    %32 = vector.load %arg4[%c224, %c0_18] : memref<448x128xf32, #tpu.memory_space<vmem>>, vector<64x64xf32>
    %cst_19 = arith.constant dense<0.000000e+00> : vector<8x64xf32>
    %33 = tpu.matmul %16, %32, %cst_19 {dimension_numbers = #tpu.dot_dimension_numbers<[1], [0], [0], [1], [0, 0, 1, 1], [], []>} : vector<8x64xf32>, vector<64x64xf32>, vector<8x64xf32> -> vector<8x64xf32>
    %34 = arith.addf %31, %33 : vector<8x64xf32>
    %c288 = arith.constant 288 : index
    %c0_20 = arith.constant 0 : index
    %35 = vector.load %arg4[%c288, %c0_20] : memref<448x128xf32, #tpu.memory_space<vmem>>, vector<64x64xf32>
    %cst_21 = arith.constant dense<0.000000e+00> : vector<8x64xf32>
    %36 = tpu.matmul %29, %35, %cst_21 {dimension_numbers = #tpu.dot_dimension_numbers<[1], [0], [0], [1], [0, 0, 1, 1], [], []>} : vector<8x64xf32>, vector<64x64xf32>, vector<8x64xf32> -> vector<8x64xf32>
    %37 = arith.addf %34, %36 : vector<8x64xf32>
    %c2 = arith.constant 2 : index
    %c0_22 = arith.constant 0 : index
    %38 = vector.load %arg5[%c2, %c0_22] : memref<8x128xf32, #tpu.memory_space<vmem>>, vector<1x64xf32>
    %39 = vector.broadcast %38 : vector<1x64xf32> to vector<8x64xf32>
    %40 = arith.addf %37, %39 : vector<8x64xf32>
    %cst_23 = arith.constant 0.000000e+00 : f32
    %41 = vector.broadcast %cst_23 : f32 to vector<8x64xf32>
    %42 = arith.maximumf %40, %41 : vector<8x64xf32>
    %c352 = arith.constant 352 : index
    %c0_24 = arith.constant 0 : index
    %43 = vector.load %arg4[%c352, %c0_24] : memref<448x128xf32, #tpu.memory_space<vmem>>, vector<64x32xf32>
    %cst_25 = arith.constant dense<0.000000e+00> : vector<8x32xf32>
    %44 = tpu.matmul %42, %43, %cst_25 {dimension_numbers = #tpu.dot_dimension_numbers<[1], [0], [0], [1], [0, 0, 1, 1], [], []>} : vector<8x64xf32>, vector<64x32xf32>, vector<8x32xf32> -> vector<8x32xf32>
    %c3 = arith.constant 3 : index
    %c0_26 = arith.constant 0 : index
    %45 = vector.load %arg5[%c3, %c0_26] : memref<8x128xf32, #tpu.memory_space<vmem>>, vector<1x32xf32>
    %46 = vector.broadcast %45 : vector<1x32xf32> to vector<8x32xf32>
    %47 = arith.addf %44, %46 : vector<8x32xf32>
    %cst_27 = arith.constant 0.000000e+00 : f32
    %48 = vector.broadcast %cst_27 : f32 to vector<8x32xf32>
    %49 = arith.maximumf %47, %48 : vector<8x32xf32>
    %c416 = arith.constant 416 : index
    %c0_28 = arith.constant 0 : index
    %50 = vector.load %arg4[%c416, %c0_28] : memref<448x128xf32, #tpu.memory_space<vmem>>, vector<32x32xf32>
    %cst_29 = arith.constant dense<0.000000e+00> : vector<8x32xf32>
    %51 = tpu.matmul %49, %50, %cst_29 {dimension_numbers = #tpu.dot_dimension_numbers<[1], [0], [0], [1], [0, 0, 1, 1], [], []>} : vector<8x32xf32>, vector<32x32xf32>, vector<8x32xf32> -> vector<8x32xf32>
    %c4 = arith.constant 4 : index
    %c0_30 = arith.constant 0 : index
    %52 = vector.load %arg5[%c4, %c0_30] : memref<8x128xf32, #tpu.memory_space<vmem>>, vector<1x32xf32>
    %53 = vector.broadcast %52 : vector<1x32xf32> to vector<8x32xf32>
    %54 = arith.addf %51, %53 : vector<8x32xf32>
    %cst_31 = arith.constant 0.000000e+00 : f32
    %55 = vector.broadcast %cst_31 : f32 to vector<8x32xf32>
    %56 = arith.maximumf %54, %55 : vector<8x32xf32>
    %c5 = arith.constant 5 : index
    %c0_32 = arith.constant 0 : index
    %57 = vector.load %arg5[%c5, %c0_32] : memref<8x128xf32, #tpu.memory_space<vmem>>, vector<1x32xf32>
    %58 = vector.broadcast %57 : vector<1x32xf32> to vector<8x32xf32>
    %59 = arith.mulf %56, %58 : vector<8x32xf32>
    %cst_33 = arith.constant dense<0.000000e+00> : vector<8xf32>
    %60 = vector.multi_reduction <add>, %59, %cst_33 [1] : vector<8x32xf32> to vector<8xf32>
    %61 = vector.shape_cast %60 : vector<8xf32> to vector<8x1xf32>
    %62 = arith.mulf %14, %16 : vector<8x64xf32>
    %c6 = arith.constant 6 : index
    %c0_34 = arith.constant 0 : index
    %63 = vector.load %arg5[%c6, %c0_34] : memref<8x128xf32, #tpu.memory_space<vmem>>, vector<1x64xf32>
    %64 = vector.broadcast %63 : vector<1x64xf32> to vector<8x64xf32>
    %65 = arith.mulf %62, %64 : vector<8x64xf32>
    %cst_35 = arith.constant dense<0.000000e+00> : vector<8xf32>
    %66 = vector.multi_reduction <add>, %65, %cst_35 [1] : vector<8x64xf32> to vector<8xf32>
    %67 = vector.shape_cast %66 : vector<8xf32> to vector<8x1xf32>
    %68 = arith.addf %61, %67 : vector<8x1xf32>
    %c7 = arith.constant 7 : index
    %c0_36 = arith.constant 0 : index
    %69 = vector.load %arg5[%c7, %c0_36] : memref<8x128xf32, #tpu.memory_space<vmem>>, vector<1x1xf32>
    %70 = vector.broadcast %69 : vector<1x1xf32> to vector<8x1xf32>
    %71 = arith.addf %68, %70 : vector<8x1xf32>
    %72 = arith.negf %71 : vector<8x1xf32>
    %73 = math.exp %72 : vector<8x1xf32>
    %cst_37 = arith.constant 1.000000e+00 : f32
    %74 = vector.broadcast %cst_37 : f32 to vector<8x1xf32>
    %75 = arith.addf %74, %73 : vector<8x1xf32>
    %76 = arith.divf %74, %75 : vector<8x1xf32>
    %c0_38 = arith.constant 0 : index
    %c0_39 = arith.constant 0 : index
    %77 = vector.load %arg6[%c0_38, %c0_39] : memref<8x1xf32, #tpu.memory_space<vmem>>, vector<8x1xf32>
    tpu.vector_store %arg6[%c0_38, %c0_39], %76 {strides = array<i32>} : memref<8x1xf32, #tpu.memory_space<vmem>>, vector<8x1xf32>,
    return
  }
  func.func @transform_0(%arg0: i32) -> (i32, i32) {
    %c0_i32 = arith.constant 0 : i32
    %c0_i32_0 = arith.constant 0 : i32
    return %arg0, %c0_i32 : i32, i32
  }
  func.func @transform_1(%arg0: i32) -> (i32, i32) {
    %c0_i32 = arith.constant 0 : i32
    %c0_i32_0 = arith.constant 0 : i32
    return %arg0, %c0_i32 : i32, i32
  }
  func.func @transform_2(%arg0: i32) -> (i32, i32) {
    %c0_i32 = arith.constant 0 : i32
    %c0_i32_0 = arith.constant 0 : i32
    %c0_i32_1 = arith.constant 0 : i32
    return %c0_i32, %c0_i32_0 : i32, i32
  }
  func.func @transform_3(%arg0: i32) -> (i32, i32) {
    %c0_i32 = arith.constant 0 : i32
    %c0_i32_0 = arith.constant 0 : i32
    %c0_i32_1 = arith.constant 0 : i32
    return %c0_i32, %c0_i32_0 : i32, i32
  }
  func.func @transform_4(%arg0: i32) -> (i32, i32) {
    %c0_i32 = arith.constant 0 : i32
    %c0_i32_0 = arith.constant 0 : i32
    %c0_i32_1 = arith.constant 0 : i32
    return %c0_i32, %c0_i32_0 : i32, i32
  }
  func.func @transform_5(%arg0: i32) -> (i32, i32) {
    %c0_i32 = arith.constant 0 : i32
    %c0_i32_0 = arith.constant 0 : i32
    return %arg0, %c0_i32 : i32, i32
  }
}

</mosaic_0001>

<llo_original>
// kernel: tpu_custom_call.1
$region0: #{tpu_custom_call.1}
  #allocation0 [shape = 'u32[]', space=smem, size = 0x4, offset = 0x4, fixed_abs, tag = 'smem constant byte address 0x4 - core index']
  #allocation1 [shape = 'u32[144,128]{1,0:T(1,128)}', space=vmem, size = 0x12000, scoped, tag = 'internal scratch']
  %s0 = inlined_call_operand.vmem [shape: s32[8,2], index: 0, kind: input, shape index: {}]
  %s1 = inlined_call_operand.vmem [shape: f32[8,32], index: 1, kind: input, shape index: {}]
  %s2 = inlined_call_operand.vmem [shape: f32[160,64], index: 2, kind: input, shape index: {}]
  %s3 = inlined_call_operand.hbm [shape: f32[448,128], index: 3, kind: input, shape index: {}]
  %s4 = inlined_call_operand.vmem [shape: f32[8,128], index: 4, kind: input, shape index: {}]
  %s5 = inlined_call_operand.vmem [shape: f32[8,1], index: 5, kind: output, shape index: {}]
  %s6 = sld [smem:[#allocation0]]
  $region34: #{tpu_custom_call.1} parent=0
    _
  %s8 = ssub.s32 1, %s6
  %s9 = scalar_select 0, %s8, %s6
  $region1: #{tpu_custom_call.1} parent=0
    #allocation2 [shape = 'u8[229376]{0}', space=vmem, size = 0x38000, scoped, tag = 'input window, operand 3, single buffered']
    #allocation3 [shape = 's32[1]{0}', space=sflag, size = 0x4, scoped, tag = 'scoped memory for tpu_custom_call.1']
    %10 = vsyncpa [#allocation3], 0
    // Predicated region
    $region2: #{tpu_custom_call.1} parent=1 // pred_check
      _
    $region3: #{tpu_custom_call.1} parent=1 // pred_check_branch
      %12 = sbr.rel (0) target = $region5
    $region4: #{tpu_custom_call.1} parent=1 // pred_region
      _
    $region5: #{tpu_custom_call.1} parent=1 // pred_fallthru
      _
    // Predicated region
    $region6: #{tpu_custom_call.1} parent=1 // pred_check
      _
    $region7: #{tpu_custom_call.1} parent=1 // pred_check_branch
      %14 = sbr.rel (0) target = $region9
    $region8: #{tpu_custom_call.1} parent=1 // pred_region
      _
    $region9: #{tpu_custom_call.1} parent=1 // pred_fallthru
      _
    // Predicated region
    $region10: #{tpu_custom_call.1} parent=1 // pred_check
      _
    $region11: #{tpu_custom_call.1} parent=1 // pred_check_branch
      %16 = sbr.rel (0) target = $region13
    $region12: #{tpu_custom_call.1} parent=1 // pred_region
      _
    $region13: #{tpu_custom_call.1} parent=1 // pred_fallthru
      _
    // Predicated region
    $region14: #{tpu_custom_call.1} parent=1 // pred_check
      _
    $region15: #{tpu_custom_call.1} parent=1 // pred_check_branch
      %18 = sbr.rel (0) target = $region17
    $region16: #{tpu_custom_call.1} parent=1 // pred_region
      %s20 = ssub.s32 7168, 7168
      %21 = vsyncadd [#allocation3], %s20
      %s22 = sshll.u32 [#allocation2], 4
      %s23 = int_to_ptr.vmem [resolvable:$true] %s22
      %28 = dma.hbm_to_vmem [thread:$0]  %s3, 7168, %s23, [#allocation3], 128, 128, 8
    $region17: #{tpu_custom_call.1} parent=1 // pred_fallthru
      _
    // Predicated region
    $region18: #{tpu_custom_call.1} parent=1 // pred_check
      _
    $region19: #{tpu_custom_call.1} parent=1 // pred_check_branch
      %30 = sbr.rel (0) target = $region21
    $region20: #{tpu_custom_call.1} parent=1 // pred_region
      _
    $region21: #{tpu_custom_call.1} parent=1 // pred_fallthru
      _
    // Predicated region
    $region22: #{tpu_custom_call.1} parent=1 // pred_check
      _
    $region23: #{tpu_custom_call.1} parent=1 // pred_check_branch
      %32 = sbr.rel (0) target = $region25
    $region24: #{tpu_custom_call.1} parent=1 // pred_region
      %33 = dma.done [#allocation3], 7168
    $region25: #{tpu_custom_call.1} parent=1 // pred_fallthru
      _
    %v34 = vld [vmem:[%s0] sm:$0xff]
    %v35 = vlaneseq
    %v36 = vand.u32 %v35, 127
    %37 = vset.pattern.permute.xlu0 0
    %38 = vperm.xlu0 %37, %v34
    %v39 = vpop.permute.xlu0 %38
    %vm40 = vcmp.eq.s32.totalorder %v36, %v39
    %v41 = vsel %vm40, 1, 0
    %v42 = vcvt.s32.f32 %v41
    %43 = vset.pattern.permute.xlu0 1
    %44 = vperm.xlu0 %43, %v34
    %v45 = vpop.permute.xlu0 %44
    %vm46 = vcmp.eq.s32.totalorder %v36, %v45
    %v47 = vsel %vm46, 1, 0
    %v48 = vcvt.s32.f32 %v47
    %v49 = vld [vmem:[%s2] sm:$0xff]
    %v50 = vld [vmem:[%s2 + $0x8] sm:$0xff]
    %v51 = vld [vmem:[%s2 + $0x10] sm:$0xff]
    %v52 = vld [vmem:[%s2 + $0x18] sm:$0xff]
    %v53 = vld [vmem:[%s2 + $0x20] sm:$0xff]
    %v54 = vld [vmem:[%s2 + $0x28] sm:$0xff]
    %v55 = vld [vmem:[%s2 + $0x30] sm:$0xff]
    %vm56 = vcmask 457728
    %v58 = vsel %vm56, %v42, 0
    %60 = vmatprep.subr.mxu0 0.0
    %61 = vmatpush1.msra.mxu0 0.0
    %62 = vmatprep.subr.mxu0 0.0
    %63 = vmatpush1.msra.mxu0 0.0
    %64 = vmatprep.subr.mxu0 0.0
    %65 = vmatpush1.msra.mxu0 0.0
    %66 = vmatprep.subr.mxu0 0.0
    %67 = vmatpush1.msra.mxu0 0.0
    %68 = vmatprep.subr.mxu0 0.0
    %69 = vmatpush1.msra.mxu0 0.0
    %70 = vmatprep.subr.mxu0 0.0
    %71 = vmatpush1.msra.mxu0 0.0
    %72 = vmatprep.subr.mxu0 0.0
    %73 = vmatpush1.msra.mxu0 0.0
    %74 = vmatprep.subr.mxu0 0.0
    %75 = vmatpush1.msra.mxu0 0.0
    %76 = vmatprep.subr.mxu0 0.0
    %77 = vmatpush1.msra.mxu0 0.0
    %78 = vmatprep.subr.mxu0 0.0
    %79 = vmatpush1.msra.mxu0 %v55
    %80 = vmatprep.subr.mxu0 0.0
    %81 = vmatpush1.msra.mxu0 %v54
    %82 = vmatprep.subr.mxu0 0.0
    %83 = vmatpush1.msra.mxu0 %v53
    %84 = vmatprep.subr.mxu0 0.0
    %85 = vmatpush1.msra.mxu0 %v52
    %86 = vmatprep.subr.mxu0 0.0
    %87 = vmatpush1.msra.mxu0 %v51
    %88 = vmatprep.subr.mxu0 0.0
    %89 = vmatpush1.msra.mxu0 %v50
    %90 = vmatprep.subr.mxu0 0.0
    %91 = vmatpush1.msra.mxu0 %v49
    %92 = vmatprep.subr.mxu0 0.0
    %93 = vmatpush2.msra.mxu0 0.0
    %94 = vmatprep.subr.mxu0 0.0
    %95 = vmatpush2.msra.mxu0 0.0
    %96 = vmatprep.subr.mxu0 0.0
    %97 = vmatpush2.msra.mxu0 0.0
    %98 = vmatprep.subr.mxu0 0.0
    %99 = vmatpush2.msra.mxu0 0.0
    %100 = vmatprep.subr.mxu0 0.0
    %101 = vmatpush2.msra.mxu0 0.0
    %102 = vmatprep.subr.mxu0 0.0
    %103 = vmatpush2.msra.mxu0 0.0
    %104 = vmatprep.subr.mxu0 0.0
    %105 = vmatpush2.msra.mxu0 0.0
    %106 = vmatprep.subr.mxu0 0.0
    %107 = vmatpush2.msra.mxu0 0.0
    %108 = vmatprep.subr.mxu0 0.0
    %109 = vmatpush2.msra.mxu0 0.0
    %110 = vmatprep.subr.mxu0 0.0
    %111 = vmatpush2.msra.mxu0 0.0
    %112 = vmatprep.subr.mxu0 0.0
    %113 = vmatpush2.msra.mxu0 0.0
    %114 = vmatprep.subr.mxu0 0.0
    %115 = vmatpush2.msra.mxu0 0.0
    %116 = vmatprep.subr.mxu0 0.0
    %117 = vmatpush2.msra.mxu0 0.0
    %118 = vmatprep.subr.mxu0 0.0
    %119 = vmatpush2.msra.mxu0 0.0
    %120 = vmatprep.subr.mxu0 0.0
    %121 = vmatpush2.msra.mxu0 0.0
    %122 = vmatprep.subr.mxu0 0.0
    %123 = vmatpush2.msra.mxu0 0.0
    %124 = vmatprep.mubr.f32.mxu0 0.0
    %125 = vmatmul.mubr.f32.gmra.mxu0 %v58
    %v126 = vpop.f32.mrf.mxu0
    %v127 = vadd.f32 0.0, %v126
    %v128 = vpop.f32.mrf.mxu0
    %129 = vdwg.mxu0
    %v130 = vld [vmem:[%s2 + $0x38] sm:$0xff]
    %v131 = vld [vmem:[%s2 + $0x40] sm:$0xff]
    %v132 = vld [vmem:[%s2 + $0x48] sm:$0xff]
    %v133 = vld [vmem:[%s2 + $0x50] sm:$0xff]
    %v134 = vld [vmem:[%s2 + $0x58] sm:$0xff]
    %v135 = vld [vmem:[%s2 + $0x60] sm:$0xff]
    %v136 = vld [vmem:[%s2 + $0x68] sm:$0xff]
    %v137 = vld [vmem:[%s2 + $0x70] sm:$0xff]
    %v138 = vld [vmem:[%s2 + $0x78] sm:$0xff]
    %v139 = vld [vmem:[%s2 + $0x80] sm:$0xff]
    %v140 = vld [vmem:[%s2 + $0x88] sm:$0xff]
    %v141 = vld [vmem:[%s2 + $0x90] sm:$0xff]
    %v142 = vld [vmem:[%s2 + $0x98] sm:$0xff]
    %vm143 = vcmask 850944
    %v145 = vsel %vm143, %v48, 0
    %147 = vmatprep.subr.mxu0 0.0
    %148 = vmatpush1.msra.mxu0 0.0
    %149 = vmatprep.subr.mxu0 0.0
    %150 = vmatpush1.msra.mxu0 0.0
    %151 = vmatprep.subr.mxu0 0.0
    %152 = vmatpush1.msra.mxu0 0.0
    %153 = vmatprep.subr.mxu0 0.0
    %154 = vmatpush1.msra.mxu0 %v142
    %155 = vmatprep.subr.mxu0 0.0
    %156 = vmatpush1.msra.mxu0 %v141
    %157 = vmatprep.subr.mxu0 0.0
    %158 = vmatpush1.msra.mxu0 %v140
    %159 = vmatprep.subr.mxu0 0.0
    %160 = vmatpush1.msra.mxu0 %v139
    %161 = vmatprep.subr.mxu0 0.0
    %162 = vmatpush1.msra.mxu0 %v138
    %163 = vmatprep.subr.mxu0 0.0
    %164 = vmatpush1.msra.mxu0 %v137
    %165 = vmatprep.subr.mxu0 0.0
    %166 = vmatpush1.msra.mxu0 %v136
    %167 = vmatprep.subr.mxu0 0.0
    %168 = vmatpush1.msra.mxu0 %v135
    %169 = vmatprep.subr.mxu0 0.0
    %170 = vmatpush1.msra.mxu0 %v134
    %171 = vmatprep.subr.mxu0 0.0
    %172 = vmatpush1.msra.mxu0 %v133
    %173 = vmatprep.subr.mxu0 0.0
    %174 = vmatpush1.msra.mxu0 %v132
    %175 = vmatprep.subr.mxu0 0.0
    %176 = vmatpush1.msra.mxu0 %v131
    %177 = vmatprep.subr.mxu0 0.0
    %178 = vmatpush1.msra.mxu0 %v130
    %179 = vmatprep.subr.mxu0 0.0
    %180 = vmatpush2.msra.mxu0 0.0
    %181 = vmatprep.subr.mxu0 0.0
    %182 = vmatpush2.msra.mxu0 0.0
    %183 = vmatprep.subr.mxu0 0.0
    %184 = vmatpush2.msra.mxu0 0.0
    %185 = vmatprep.subr.mxu0 0.0
    %186 = vmatpush2.msra.mxu0 0.0
    %187 = vmatprep.subr.mxu0 0.0
    %188 = vmatpush2.msra.mxu0 0.0
    %189 = vmatprep.subr.mxu0 0.0
    %190 = vmatpush2.msra.mxu0 0.0
    %191 = vmatprep.subr.mxu0 0.0
    %192 = vmatpush2.msra.mxu0 0.0
    %193 = vmatprep.subr.mxu0 0.0
    %194 = vmatpush2.msra.mxu0 0.0
    %195 = vmatprep.subr.mxu0 0.0
    %196 = vmatpush2.msra.mxu0 0.0
    %197 = vmatprep.subr.mxu0 0.0
    %198 = vmatpush2.msra.mxu0 0.0
    %199 = vmatprep.subr.mxu0 0.0
    %200 = vmatpush2.msra.mxu0 0.0
    %201 = vmatprep.subr.mxu0 0.0
    %202 = vmatpush2.msra.mxu0 0.0
    %203 = vmatprep.subr.mxu0 0.0
    %204 = vmatpush2.msra.mxu0 0.0
    %205 = vmatprep.subr.mxu0 0.0
    %206 = vmatpush2.msra.mxu0 0.0
    %207 = vmatprep.subr.mxu0 0.0
    %208 = vmatpush2.msra.mxu0 0.0
    %209 = vmatprep.subr.mxu0 0.0
    %210 = vmatpush2.msra.mxu0 0.0
    %211 = vmatprep.mubr.f32.mxu0 0.0
    %212 = vmatmul.mubr.f32.gmra.mxu0 %v145
    %v213 = vpop.f32.mrf.mxu0
    %v214 = vadd.f32 0.0, %v213
    %v215 = vpop.f32.mrf.mxu0
    %216 = vdwg.mxu0
    %v217 = vld [vmem:[%s1] sm:$0xff]
    %v218 = vld [vmem:[#allocation2] sm:$0xff]
    %v219 = vld [vmem:[#allocation2 + $0x8] sm:$0xff]
    %v220 = vld [vmem:[#allocation2 + $0x10] sm:$0xff]
    %v221 = vld [vmem:[#allocation2 + $0x18] sm:$0xff]
    %v222 = vld [vmem:[%s4] sm:$0x1]
    %v223 = vlaneseq
    %v224 = vshrl.u32 %v223, 7
    %v225 = vsub.s32 0, %v224
    %v226 = vrot.slane %v222, %v225
    %vm227 = vcmask 261120
    %v229 = vsel %vm227, %v217, 0
    %231 = vmatprep.subr.mxu0 0.0
    %232 = vmatpush1.msra.mxu0 0.0
    %233 = vmatprep.subr.mxu0 0.0
    %234 = vmatpush1.msra.mxu0 0.0
    %235 = vmatprep.subr.mxu0 0.0
    %236 = vmatpush1.msra.mxu0 0.0
    %237 = vmatprep.subr.mxu0 0.0
    %238 = vmatpush1.msra.mxu0 0.0
    %239 = vmatprep.subr.mxu0 0.0
    %240 = vmatpush1.msra.mxu0 0.0
    %241 = vmatprep.subr.mxu0 0.0
    %242 = vmatpush1.msra.mxu0 0.0
    %243 = vmatprep.subr.mxu0 0.0
    %244 = vmatpush1.msra.mxu0 0.0
    %245 = vmatprep.subr.mxu0 0.0
    %246 = vmatpush1.msra.mxu0 0.0
    %247 = vmatprep.subr.mxu0 0.0
    %248 = vmatpush1.msra.mxu0 0.0
    %249 = vmatprep.subr.mxu0 0.0
    %250 = vmatpush1.msra.mxu0 0.0
    %251 = vmatprep.subr.mxu0 0.0
    %252 = vmatpush1.msra.mxu0 0.0
    %253 = vmatprep.subr.mxu0 0.0
    %254 = vmatpush1.msra.mxu0 0.0
    %255 = vmatprep.subr.mxu0 0.0
    %256 = vmatpush1.msra.mxu0 %v221
    %257 = vmatprep.subr.mxu0 0.0
    %258 = vmatpush1.msra.mxu0 %v220
    %259 = vmatprep.subr.mxu0 0.0
    %260 = vmatpush1.msra.mxu0 %v219
    %261 = vmatprep.subr.mxu0 0.0
    %262 = vmatpush1.msra.mxu0 %v218
    %263 = vmatprep.subr.mxu0 0.0
    %264 = vmatpush2.msra.mxu0 0.0
    %265 = vmatprep.subr.mxu0 0.0
    %266 = vmatpush2.msra.mxu0 0.0
    %267 = vmatprep.subr.mxu0 0.0
    %268 = vmatpush2.msra.mxu0 0.0
    %269 = vmatprep.subr.mxu0 0.0
    %270 = vmatpush2.msra.mxu0 0.0
    %271 = vmatprep.subr.mxu0 0.0
    %272 = vmatpush2.msra.mxu0 0.0
    %273 = vmatprep.subr.mxu0 0.0
    %274 = vmatpush2.msra.mxu0 0.0
    %275 = vmatprep.subr.mxu0 0.0
    %276 = vmatpush2.msra.mxu0 0.0
    %277 = vmatprep.subr.mxu0 0.0
    %278 = vmatpush2.msra.mxu0 0.0
    %279 = vmatprep.subr.mxu0 0.0
    %280 = vmatpush2.msra.mxu0 0.0
    %281 = vmatprep.subr.mxu0 0.0
    %282 = vmatpush2.msra.mxu0 0.0
    %283 = vmatprep.subr.mxu0 0.0
    %284 = vmatpush2.msra.mxu0 0.0
    %285 = vmatprep.subr.mxu0 0.0
    %286 = vmatpush2.msra.mxu0 0.0
    %287 = vmatprep.subr.mxu0 0.0
    %288 = vmatpush2.msra.mxu0 0.0
    %289 = vmatprep.subr.mxu0 0.0
    %290 = vmatpush2.msra.mxu0 0.0
    %291 = vmatprep.subr.mxu0 0.0
    %292 = vmatpush2.msra.mxu0 0.0
    %293 = vmatprep.subr.mxu0 0.0
    %294 = vmatpush2.msra.mxu0 0.0
    %295 = vmatprep.mubr.f32.mxu0 0.0
    %296 = vmatmul.mubr.f32.gmra.mxu0 %v229
    %v297 = vpop.f32.mrf.mxu0
    %v298 = vadd.f32 %v226, %v297
    %v299 = vpop.f32.mrf.mxu0
    %300 = vdwg.mxu0
    %v301 = vmax.f32 %v298, 0.0
    %v302 = vld [vmem:[#allocation2 + $0x20] sm:$0xff]
    %v303 = vld [vmem:[#allocation2 + $0x28] sm:$0xff]
    %v304 = vld [vmem:[#allocation2 + $0x30] sm:$0xff]
    %v305 = vld [vmem:[#allocation2 + $0x38] sm:$0xff]
    %v306 = vld [vmem:[#allocation2 + $0x40] sm:$0xff]
    %v307 = vld [vmem:[#allocation2 + $0x48] sm:$0xff]
    %v308 = vld [vmem:[#allocation2 + $0x50] sm:$0xff]
    %v309 = vld [vmem:[#allocation2 + $0x58] sm:$0xff]
    %v310 = vld [vmem:[#allocation2 + $0x60] sm:$0xff]
    %v311 = vld [vmem:[#allocation2 + $0x68] sm:$0xff]
    %v312 = vld [vmem:[#allocation2 + $0x70] sm:$0xff]
    %v313 = vld [vmem:[#allocation2 + $0x78] sm:$0xff]
    %v314 = vld [vmem:[#allocation2 + $0x80] sm:$0xff]
    %v315 = vld [vmem:[#allocation2 + $0x88] sm:$0xff]
    %v316 = vld [vmem:[#allocation2 + $0x90] sm:$0xff]
    %v317 = vld [vmem:[#allocation2 + $0x98] sm:$0xff]
    %v318 = vld [vmem:[%s4 + $0x1] sm:$0x1]
    %v319 = vlaneseq
    %v320 = vshrl.u32 %v319, 7
    %v321 = vsub.s32 0, %v320
    %v322 = vrot.slane %v318, %v321
    %323 = vmatprep.subr.mxu0 0.0
    %324 = vmatpush1.msra.mxu0 %v317
    %325 = vmatprep.subr.mxu0 0.0
    %326 = vmatpush1.msra.mxu0 %v316
    %327 = vmatprep.subr.mxu0 0.0
    %328 = vmatpush1.msra.mxu0 %v315
    %329 = vmatprep.subr.mxu0 0.0
    %330 = vmatpush1.msra.mxu0 %v314
    %331 = vmatprep.subr.mxu0 0.0
    %332 = vmatpush1.msra.mxu0 %v313
    %333 = vmatprep.subr.mxu0 0.0
    %334 = vmatpush1.msra.mxu0 %v312
    %335 = vmatprep.subr.mxu0 0.0
    %336 = vmatpush1.msra.mxu0 %v311
    %337 = vmatprep.subr.mxu0 0.0
    %338 = vmatpush1.msra.mxu0 %v310
    %339 = vmatprep.subr.mxu0 0.0
    %340 = vmatpush1.msra.mxu0 %v309
    %341 = vmatprep.subr.mxu0 0.0
    %342 = vmatpush1.msra.mxu0 %v308
    %343 = vmatprep.subr.mxu0 0.0
    %344 = vmatpush1.msra.mxu0 %v307
    %345 = vmatprep.subr.mxu0 0.0
    %346 = vmatpush1.msra.mxu0 %v306
    %347 = vmatprep.subr.mxu0 0.0
    %348 = vmatpush1.msra.mxu0 %v305
    %349 = vmatprep.subr.mxu0 0.0
    %350 = vmatpush1.msra.mxu0 %v304
    %351 = vmatprep.subr.mxu0 0.0
    %352 = vmatpush1.msra.mxu0 %v303
    %353 = vmatprep.subr.mxu0 0.0
    %354 = vmatpush1.msra.mxu0 %v302
    %355 = vmatprep.subr.mxu0 0.0
    %356 = vmatpush2.msra.mxu0 0.0
    %357 = vmatprep.subr.mxu0 0.0
    %358 = vmatpush2.msra.mxu0 0.0
    %359 = vmatprep.subr.mxu0 0.0
    %360 = vmatpush2.msra.mxu0 0.0
    %361 = vmatprep.subr.mxu0 0.0
    %362 = vmatpush2.msra.mxu0 0.0
    %363 = vmatprep.subr.mxu0 0.0
    %364 = vmatpush2.msra.mxu0 0.0
    %365 = vmatprep.subr.mxu0 0.0
    %366 = vmatpush2.msra.mxu0 0.0
    %367 = vmatprep.subr.mxu0 0.0
    %368 = vmatpush2.msra.mxu0 0.0
    %369 = vmatprep.subr.mxu0 0.0
    %370 = vmatpush2.msra.mxu0 0.0
    %371 = vmatprep.subr.mxu0 0.0
    %372 = vmatpush2.msra.mxu0 0.0
    %373 = vmatprep.subr.mxu0 0.0
    %374 = vmatpush2.msra.mxu0 0.0
    %375 = vmatprep.subr.mxu0 0.0
    %376 = vmatpush2.msra.mxu0 0.0
    %377 = vmatprep.subr.mxu0 0.0
    %378 = vmatpush2.msra.mxu0 0.0
    %379 = vmatprep.subr.mxu0 0.0
    %380 = vmatpush2.msra.mxu0 0.0
    %381 = vmatprep.subr.mxu0 0.0
    %382 = vmatpush2.msra.mxu0 0.0
    %383 = vmatprep.subr.mxu0 0.0
    %384 = vmatpush2.msra.mxu0 0.0
    %385 = vmatprep.subr.mxu0 0.0
    %386 = vmatpush2.msra.mxu0 0.0
    %387 = vmatprep.mubr.f32.mxu0 0.0
    %388 = vmatmul.mubr.f32.gmra.mxu0 %v301
    %v389 = vpop.f32.mrf.mxu0
    %v390 = vadd.f32 %v322, %v389
    %v391 = vpop.f32.mrf.mxu0
    %392 = vdwg.mxu0
    %v393 = vld [vmem:[#allocation2 + $0xa0] sm:$0xff]
    %v394 = vld [vmem:[#allocation2 + $0xa8] sm:$0xff]
    %v395 = vld [vmem:[#allocation2 + $0xb0] sm:$0xff]
    %v396 = vld [vmem:[#allocation2 + $0xb8] sm:$0xff]
    %v397 = vld [vmem:[#allocation2 + $0xc0] sm:$0xff]
    %v398 = vld [vmem:[#allocation2 + $0xc8] sm:$0xff]
    %v399 = vld [vmem:[#allocation2 + $0xd0] sm:$0xff]
    %v400 = vld [vmem:[#allocation2 + $0xd8] sm:$0xff]
    %v401 = vld [vmem:[#allocation2 + $0xe0] sm:$0xff]
    %v402 = vld [vmem:[#allocation2 + $0xe8] sm:$0xff]
    %v403 = vld [vmem:[#allocation2 + $0xf0] sm:$0xff]
    %v404 = vld [vmem:[#allocation2 + $0xf8] sm:$0xff]
    %v405 = vld [vmem:[#allocation2 + $0x100] sm:$0xff]
    %v406 = vld [vmem:[#allocation2 + $0x108] sm:$0xff]
    %v407 = vld [vmem:[#allocation2 + $0x110] sm:$0xff]
    %v408 = vld [vmem:[#allocation2 + $0x118] sm:$0xff]
    %vm409 = vcmask 523264
    %v411 = vsel %vm409, %v214, 0
    %413 = vmatprep.subr.mxu0 0.0
    %414 = vmatpush1.msra.mxu0 0.0
    %415 = vmatprep.subr.mxu0 0.0
    %416 = vmatpush1.msra.mxu0 0.0
    %417 = vmatprep.subr.mxu0 0.0
    %418 = vmatpush1.msra.mxu0 0.0
    %419 = vmatprep.subr.mxu0 0.0
    %420 = vmatpush1.msra.mxu0 0.0
    %421 = vmatprep.subr.mxu0 0.0
    %422 = vmatpush1.msra.mxu0 0.0
    %423 = vmatprep.subr.mxu0 0.0
    %424 = vmatpush1.msra.mxu0 0.0
    %425 = vmatprep.subr.mxu0 0.0
    %426 = vmatpush1.msra.mxu0 0.0
    %427 = vmatprep.subr.mxu0 0.0
    %428 = vmatpush1.msra.mxu0 0.0
    %429 = vmatprep.subr.mxu0 0.0
    %430 = vmatpush1.msra.mxu0 %v408
    %431 = vmatprep.subr.mxu0 0.0
    %432 = vmatpush1.msra.mxu0 %v407
    %433 = vmatprep.subr.mxu0 0.0
    %434 = vmatpush1.msra.mxu0 %v406
    %435 = vmatprep.subr.mxu0 0.0
    %436 = vmatpush1.msra.mxu0 %v405
    %437 = vmatprep.subr.mxu0 0.0
    %438 = vmatpush1.msra.mxu0 %v404
    %439 = vmatprep.subr.mxu0 0.0
    %440 = vmatpush1.msra.mxu0 %v403
    %441 = vmatprep.subr.mxu0 0.0
    %442 = vmatpush1.msra.mxu0 %v402
    %443 = vmatprep.subr.mxu0 0.0
    %444 = vmatpush1.msra.mxu0 %v401
    %445 = vmatprep.subr.mxu0 0.0
    %446 = vmatpush2.msra.mxu0 0.0
    %447 = vmatprep.subr.mxu0 0.0
    %448 = vmatpush2.msra.mxu0 0.0
    %449 = vmatprep.subr.mxu0 0.0
    %450 = vmatpush2.msra.mxu0 0.0
    %451 = vmatprep.subr.mxu0 0.0
    %452 = vmatpush2.msra.mxu0 0.0
    %453 = vmatprep.subr.mxu0 0.0
    %454 = vmatpush2.msra.mxu0 0.0
    %455 = vmatprep.subr.mxu0 0.0
    %456 = vmatpush2.msra.mxu0 0.0
    %457 = vmatprep.subr.mxu0 0.0
    %458 = vmatpush2.msra.mxu0 0.0
    %459 = vmatprep.subr.mxu0 0.0
    %460 = vmatpush2.msra.mxu0 0.0
    %461 = vmatprep.subr.mxu0 0.0
    %462 = vmatpush2.msra.mxu0 0.0
    %463 = vmatprep.subr.mxu0 0.0
    %464 = vmatpush2.msra.mxu0 0.0
    %465 = vmatprep.subr.mxu0 0.0
    %466 = vmatpush2.msra.mxu0 0.0
    %467 = vmatprep.subr.mxu0 0.0
    %468 = vmatpush2.msra.mxu0 0.0
    %469 = vmatprep.subr.mxu0 0.0
    %470 = vmatpush2.msra.mxu0 0.0
    %471 = vmatprep.subr.mxu0 0.0
    %472 = vmatpush2.msra.mxu0 0.0
    %473 = vmatprep.subr.mxu0 0.0
    %474 = vmatpush2.msra.mxu0 0.0
    %475 = vmatprep.subr.mxu0 0.0
    %476 = vmatpush2.msra.mxu0 0.0
    %477 = vmatprep.mubr.f32.mxu0 0.0
    %478 = vmatmul.mubr.f32.gmra.mxu0 %v411
    %v479 = vpop.f32.mrf.mxu0
    %v480 = vadd.f32 0.0, %v479
    %v481 = vpop.f32.mrf.mxu0
    %482 = vdwg.mxu0
    %v484 = vsel %vm409, %v127, 0
    %486 = vmatprep.subr.mxu0 0.0
    %487 = vmatpush1.msra.mxu0 0.0
    %488 = vmatprep.subr.mxu0 0.0
    %489 = vmatpush1.msra.mxu0 0.0
    %490 = vmatprep.subr.mxu0 0.0
    %491 = vmatpush1.msra.mxu0 0.0
    %492 = vmatprep.subr.mxu0 0.0
    %493 = vmatpush1.msra.mxu0 0.0
    %494 = vmatprep.subr.mxu0 0.0
    %495 = vmatpush1.msra.mxu0 0.0
    %496 = vmatprep.subr.mxu0 0.0
    %497 = vmatpush1.msra.mxu0 0.0
    %498 = vmatprep.subr.mxu0 0.0
    %499 = vmatpush1.msra.mxu0 0.0
    %500 = vmatprep.subr.mxu0 0.0
    %501 = vmatpush1.msra.mxu0 0.0
    %502 = vmatprep.subr.mxu0 0.0
    %503 = vmatpush1.msra.mxu0 %v400
    %504 = vmatprep.subr.mxu0 0.0
    %505 = vmatpush1.msra.mxu0 %v399
    %506 = vmatprep.subr.mxu0 0.0
    %507 = vmatpush1.msra.mxu0 %v398
    %508 = vmatprep.subr.mxu0 0.0
    %509 = vmatpush1.msra.mxu0 %v397
    %510 = vmatprep.subr.mxu0 0.0
    %511 = vmatpush1.msra.mxu0 %v396
    %512 = vmatprep.subr.mxu0 0.0
    %513 = vmatpush1.msra.mxu0 %v395
    %514 = vmatprep.subr.mxu0 0.0
    %515 = vmatpush1.msra.mxu0 %v394
    %516 = vmatprep.subr.mxu0 0.0
    %517 = vmatpush1.msra.mxu0 %v393
    %518 = vmatprep.subr.mxu0 0.0
    %519 = vmatpush2.msra.mxu0 0.0
    %520 = vmatprep.subr.mxu0 0.0
    %521 = vmatpush2.msra.mxu0 0.0
    %522 = vmatprep.subr.mxu0 0.0
    %523 = vmatpush2.msra.mxu0 0.0
    %524 = vmatprep.subr.mxu0 0.0
    %525 = vmatpush2.msra.mxu0 0.0
    %526 = vmatprep.subr.mxu0 0.0
    %527 = vmatpush2.msra.mxu0 0.0
    %528 = vmatprep.subr.mxu0 0.0
    %529 = vmatpush2.msra.mxu0 0.0
    %530 = vmatprep.subr.mxu0 0.0
    %531 = vmatpush2.msra.mxu0 0.0
    %532 = vmatprep.subr.mxu0 0.0
    %533 = vmatpush2.msra.mxu0 0.0
    %534 = vmatprep.subr.mxu0 0.0
    %535 = vmatpush2.msra.mxu0 0.0
    %536 = vmatprep.subr.mxu0 0.0
    %537 = vmatpush2.msra.mxu0 0.0
    %538 = vmatprep.subr.mxu0 0.0
    %539 = vmatpush2.msra.mxu0 0.0
    %540 = vmatprep.subr.mxu0 0.0
    %541 = vmatpush2.msra.mxu0 0.0
    %542 = vmatprep.subr.mxu0 0.0
    %543 = vmatpush2.msra.mxu0 0.0
    %544 = vmatprep.subr.mxu0 0.0
    %545 = vmatpush2.msra.mxu0 0.0
    %546 = vmatprep.subr.mxu0 0.0
    %547 = vmatpush2.msra.mxu0 0.0
    %548 = vmatprep.subr.mxu0 0.0
    %549 = vmatpush2.msra.mxu0 0.0
    %550 = vmatprep.mubr.f32.mxu0 0.0
    %551 = vmatmul.mubr.f32.gmra.mxu0 %v484
    %v552 = vpop.f32.mrf.mxu0
    %v553 = vadd.f32 %v480, %v552
    %v554 = vpop.f32.mrf.mxu0
    %555 = vdwg.mxu0
    %v556 = vld [vmem:[#allocation2 + $0x120] sm:$0xff]
    %v557 = vld [vmem:[#allocation2 + $0x128] sm:$0xff]
    %v558 = vld [vmem:[#allocation2 + $0x130] sm:$0xff]
    %v559 = vld [vmem:[#allocation2 + $0x138] sm:$0xff]
    %v560 = vld [vmem:[#allocation2 + $0x140] sm:$0xff]
    %v561 = vld [vmem:[#allocation2 + $0x148] sm:$0xff]
    %v562 = vld [vmem:[#allocation2 + $0x150] sm:$0xff]
    %v563 = vld [vmem:[#allocation2 + $0x158] sm:$0xff]
    %v565 = vsel %vm409, %v390, 0
    %567 = vmatprep.subr.mxu0 0.0
    %568 = vmatpush1.msra.mxu0 0.0
    %569 = vmatprep.subr.mxu0 0.0
    %570 = vmatpush1.msra.mxu0 0.0
    %571 = vmatprep.subr.mxu0 0.0
    %572 = vmatpush1.msra.mxu0 0.0
    %573 = vmatprep.subr.mxu0 0.0
    %574 = vmatpush1.msra.mxu0 0.0
    %575 = vmatprep.subr.mxu0 0.0
    %576 = vmatpush1.msra.mxu0 0.0
    %577 = vmatprep.subr.mxu0 0.0
    %578 = vmatpush1.msra.mxu0 0.0
    %579 = vmatprep.subr.mxu0 0.0
    %580 = vmatpush1.msra.mxu0 0.0
    %581 = vmatprep.subr.mxu0 0.0
    %582 = vmatpush1.msra.mxu0 0.0
    %583 = vmatprep.subr.mxu0 0.0
    %584 = vmatpush1.msra.mxu0 %v563
    %585 = vmatprep.subr.mxu0 0.0
    %586 = vmatpush1.msra.mxu0 %v562
    %587 = vmatprep.subr.mxu0 0.0
    %588 = vmatpush1.msra.mxu0 %v561
    %589 = vmatprep.subr.mxu0 0.0
    %590 = vmatpush1.msra.mxu0 %v560
    %591 = vmatprep.subr.mxu0 0.0
    %592 = vmatpush1.msra.mxu0 %v559
    %593 = vmatprep.subr.mxu0 0.0
    %594 = vmatpush1.msra.mxu0 %v558
    %595 = vmatprep.subr.mxu0 0.0
    %596 = vmatpush1.msra.mxu0 %v557
    %597 = vmatprep.subr.mxu0 0.0
    %598 = vmatpush1.msra.mxu0 %v556
    %599 = vmatprep.subr.mxu0 0.0
    %600 = vmatpush2.msra.mxu0 0.0
    %601 = vmatprep.subr.mxu0 0.0
    %602 = vmatpush2.msra.mxu0 0.0
    %603 = vmatprep.subr.mxu0 0.0
    %604 = vmatpush2.msra.mxu0 0.0
    %605 = vmatprep.subr.mxu0 0.0
    %606 = vmatpush2.msra.mxu0 0.0
    %607 = vmatprep.subr.mxu0 0.0
    %608 = vmatpush2.msra.mxu0 0.0
    %609 = vmatprep.subr.mxu0 0.0
    %610 = vmatpush2.msra.mxu0 0.0
    %611 = vmatprep.subr.mxu0 0.0
    %612 = vmatpush2.msra.mxu0 0.0
    %613 = vmatprep.subr.mxu0 0.0
    %614 = vmatpush2.msra.mxu0 0.0
    %615 = vmatprep.subr.mxu0 0.0
    %616 = vmatpush2.msra.mxu0 0.0
    %617 = vmatprep.subr.mxu0 0.0
    %618 = vmatpush2.msra.mxu0 0.0
    %619 = vmatprep.subr.mxu0 0.0
    %620 = vmatpush2.msra.mxu0 0.0
    %621 = vmatprep.subr.mxu0 0.0
    %622 = vmatpush2.msra.mxu0 0.0
    %623 = vmatprep.subr.mxu0 0.0
    %624 = vmatpush2.msra.mxu0 0.0
    %625 = vmatprep.subr.mxu0 0.0
    %626 = vmatpush2.msra.mxu0 0.0
    %627 = vmatprep.subr.mxu0 0.0
    %628 = vmatpush2.msra.mxu0 0.0
    %629 = vmatprep.subr.mxu0 0.0
    %630 = vmatpush2.msra.mxu0 0.0
    %631 = vmatprep.mubr.f32.mxu0 0.0
    %632 = vmatmul.mubr.f32.gmra.mxu0 %v565
    %v633 = vpop.f32.mrf.mxu0
    %v634 = vadd.f32 0.0, %v633
    %v635 = vpop.f32.mrf.mxu0
    %636 = vdwg.mxu0
    %v637 = vadd.f32 %v553, %v634
    %v638 = vld [vmem:[%s4 + $0x2] sm:$0x1]
    %v639 = vlaneseq
    %v640 = vshrl.u32 %v639, 7
    %v641 = vsub.s32 0, %v640
    %v642 = vrot.slane %v638, %v641
    %v643 = vadd.f32 %v637, %v642
    %v644 = vmax.f32 %v643, 0.0
    %v645 = vld [vmem:[#allocation2 + $0x160] sm:$0xff]
    %v646 = vld [vmem:[#allocation2 + $0x168] sm:$0xff]
    %v647 = vld [vmem:[#allocation2 + $0x170] sm:$0xff]
    %v648 = vld [vmem:[#allocation2 + $0x178] sm:$0xff]
    %v649 = vld [vmem:[#allocation2 + $0x180] sm:$0xff]
    %v650 = vld [vmem:[#allocation2 + $0x188] sm:$0xff]
    %v651 = vld [vmem:[#allocation2 + $0x190] sm:$0xff]
    %v652 = vld [vmem:[#allocation2 + $0x198] sm:$0xff]
    %v653 = vld [vmem:[%s4 + $0x3] sm:$0x1]
    %v654 = vlaneseq
    %v655 = vshrl.u32 %v654, 7
    %v656 = vsub.s32 0, %v655
    %v657 = vrot.slane %v653, %v656
    %v659 = vsel %vm409, %v644, 0
    %661 = vmatprep.subr.mxu0 0.0
    %662 = vmatpush1.msra.mxu0 0.0
    %663 = vmatprep.subr.mxu0 0.0
    %664 = vmatpush1.msra.mxu0 0.0
    %665 = vmatprep.subr.mxu0 0.0
    %666 = vmatpush1.msra.mxu0 0.0
    %667 = vmatprep.subr.mxu0 0.0
    %668 = vmatpush1.msra.mxu0 0.0
    %669 = vmatprep.subr.mxu0 0.0
    %670 = vmatpush1.msra.mxu0 0.0
    %671 = vmatprep.subr.mxu0 0.0
    %672 = vmatpush1.msra.mxu0 0.0
    %673 = vmatprep.subr.mxu0 0.0
    %674 = vmatpush1.msra.mxu0 0.0
    %675 = vmatprep.subr.mxu0 0.0
    %676 = vmatpush1.msra.mxu0 0.0
    %677 = vmatprep.subr.mxu0 0.0
    %678 = vmatpush1.msra.mxu0 %v652
    %679 = vmatprep.subr.mxu0 0.0
    %680 = vmatpush1.msra.mxu0 %v651
    %681 = vmatprep.subr.mxu0 0.0
    %682 = vmatpush1.msra.mxu0 %v650
    %683 = vmatprep.subr.mxu0 0.0
    %684 = vmatpush1.msra.mxu0 %v649
    %685 = vmatprep.subr.mxu0 0.0
    %686 = vmatpush1.msra.mxu0 %v648
    %687 = vmatprep.subr.mxu0 0.0
    %688 = vmatpush1.msra.mxu0 %v647
    %689 = vmatprep.subr.mxu0 0.0
    %690 = vmatpush1.msra.mxu0 %v646
    %691 = vmatprep.subr.mxu0 0.0
    %692 = vmatpush1.msra.mxu0 %v645
    %693 = vmatprep.subr.mxu0 0.0
    %694 = vmatpush2.msra.mxu0 0.0
    %695 = vmatprep.subr.mxu0 0.0
    %696 = vmatpush2.msra.mxu0 0.0
    %697 = vmatprep.subr.mxu0 0.0
    %698 = vmatpush2.msra.mxu0 0.0
    %699 = vmatprep.subr.mxu0 0.0
    %700 = vmatpush2.msra.mxu0 0.0
    %701 = vmatprep.subr.mxu0 0.0
    %702 = vmatpush2.msra.mxu0 0.0
    %703 = vmatprep.subr.mxu0 0.0
    %704 = vmatpush2.msra.mxu0 0.0
    %705 = vmatprep.subr.mxu0 0.0
    %706 = vmatpush2.msra.mxu0 0.0
    %707 = vmatprep.subr.mxu0 0.0
    %708 = vmatpush2.msra.mxu0 0.0
    %709 = vmatprep.subr.mxu0 0.0
    %710 = vmatpush2.msra.mxu0 0.0
    %711 = vmatprep.subr.mxu0 0.0
    %712 = vmatpush2.msra.mxu0 0.0
    %713 = vmatprep.subr.mxu0 0.0
    %714 = vmatpush2.msra.mxu0 0.0
    %715 = vmatprep.subr.mxu0 0.0
    %716 = vmatpush2.msra.mxu0 0.0
    %717 = vmatprep.subr.mxu0 0.0
    %718 = vmatpush2.msra.mxu0 0.0
    %719 = vmatprep.subr.mxu0 0.0
    %720 = vmatpush2.msra.mxu0 0.0
    %721 = vmatprep.subr.mxu0 0.0
    %722 = vmatpush2.msra.mxu0 0.0
    %723 = vmatprep.subr.mxu0 0.0
    %724 = vmatpush2.msra.mxu0 0.0
    %725 = vmatprep.mubr.f32.mxu0 0.0
    %726 = vmatmul.mubr.f32.gmra.mxu0 %v659
    %v727 = vpop.f32.mrf.mxu0
    %v728 = vadd.f32 %v657, %v727
    %v729 = vpop.f32.mrf.mxu0
    %730 = vdwg.mxu0
    %v731 = vmax.f32 %v728, 0.0
    %v732 = vld [vmem:[#allocation2 + $0x1a0] sm:$0xff]
    %v733 = vld [vmem:[#allocation2 + $0x1a8] sm:$0xff]
    %v734 = vld [vmem:[#allocation2 + $0x1b0] sm:$0xff]
    %v735 = vld [vmem:[#allocation2 + $0x1b8] sm:$0xff]
    %v736 = vld [vmem:[%s4 + $0x4] sm:$0x1]
    %v737 = vlaneseq
    %v738 = vshrl.u32 %v737, 7
    %v739 = vsub.s32 0, %v738
    %v740 = vrot.slane %v736, %v739
    %v742 = vsel %vm227, %v731, 0
    %744 = vmatprep.subr.mxu0 0.0
    %745 = vmatpush1.msra.mxu0 0.0
    %746 = vmatprep.subr.mxu0 0.0
    %747 = vmatpush1.msra.mxu0 0.0
    %748 = vmatprep.subr.mxu0 0.0
    %749 = vmatpush1.msra.mxu0 0.0
    %750 = vmatprep.subr.mxu0 0.0
    %751 = vmatpush1.msra.mxu0 0.0
    %752 = vmatprep.subr.mxu0 0.0
    %753 = vmatpush1.msra.mxu0 0.0
    %754 = vmatprep.subr.mxu0 0.0
    %755 = vmatpush1.msra.mxu0 0.0
    %756 = vmatprep.subr.mxu0 0.0
    %757 = vmatpush1.msra.mxu0 0.0
    %758 = vmatprep.subr.mxu0 0.0
    %759 = vmatpush1.msra.mxu0 0.0
    %760 = vmatprep.subr.mxu0 0.0
    %761 = vmatpush1.msra.mxu0 0.0
    %762 = vmatprep.subr.mxu0 0.0
    %763 = vmatpush1.msra.mxu0 0.0
    %764 = vmatprep.subr.mxu0 0.0
    %765 = vmatpush1.msra.mxu0 0.0
    %766 = vmatprep.subr.mxu0 0.0
    %767 = vmatpush1.msra.mxu0 0.0
    %768 = vmatprep.subr.mxu0 0.0
    %769 = vmatpush1.msra.mxu0 %v735
    %770 = vmatprep.subr.mxu0 0.0
    %771 = vmatpush1.msra.mxu0 %v734
    %772 = vmatprep.subr.mxu0 0.0
    %773 = vmatpush1.msra.mxu0 %v733
    %774 = vmatprep.subr.mxu0 0.0
    %775 = vmatpush1.msra.mxu0 %v732
    %776 = vmatprep.subr.mxu0 0.0
    %777 = vmatpush2.msra.mxu0 0.0
    %778 = vmatprep.subr.mxu0 0.0
    %779 = vmatpush2.msra.mxu0 0.0
    %780 = vmatprep.subr.mxu0 0.0
    %781 = vmatpush2.msra.mxu0 0.0
    %782 = vmatprep.subr.mxu0 0.0
    %783 = vmatpush2.msra.mxu0 0.0
    %784 = vmatprep.subr.mxu0 0.0
    %785 = vmatpush2.msra.mxu0 0.0
    %786 = vmatprep.subr.mxu0 0.0
    %787 = vmatpush2.msra.mxu0 0.0
    %788 = vmatprep.subr.mxu0 0.0
    %789 = vmatpush2.msra.mxu0 0.0
    %790 = vmatprep.subr.mxu0 0.0
    %791 = vmatpush2.msra.mxu0 0.0
    %792 = vmatprep.subr.mxu0 0.0
    %793 = vmatpush2.msra.mxu0 0.0
    %794 = vmatprep.subr.mxu0 0.0
    %795 = vmatpush2.msra.mxu0 0.0
    %796 = vmatprep.subr.mxu0 0.0
    %797 = vmatpush2.msra.mxu0 0.0
    %798 = vmatprep.subr.mxu0 0.0
    %799 = vmatpush2.msra.mxu0 0.0
    %800 = vmatprep.subr.mxu0 0.0
    %801 = vmatpush2.msra.mxu0 0.0
    %802 = vmatprep.subr.mxu0 0.0
    %803 = vmatpush2.msra.mxu0 0.0
    %804 = vmatprep.subr.mxu0 0.0
    %805 = vmatpush2.msra.mxu0 0.0
    %806 = vmatprep.subr.mxu0 0.0
    %807 = vmatpush2.msra.mxu0 0.0
    %808 = vmatprep.mubr.f32.mxu0 0.0
    %809 = vmatmul.mubr.f32.gmra.mxu0 %v742
    %v810 = vpop.f32.mrf.mxu0
    %v811 = vadd.f32 %v740, %v810
    %v812 = vpop.f32.mrf.mxu0
    %813 = vdwg.mxu0
    %v814 = vmax.f32 %v811, 0.0
    %v815 = vld [vmem:[%s4 + $0x5] sm:$0x1]
    %v816 = vlaneseq
    %v817 = vshrl.u32 %v816, 7
    %v818 = vsub.s32 0, %v817
    %v819 = vrot.slane %v815, %v818
    %v820 = vmul.f32 %v814, %v819
    %v821 = vsel %vm227, %v820, 0.0
    %822 = vadd.xlane.f32.xlu0 %v821
    %v823 = vpop.xlane.xlu0 %822
    %v824 = vmul.f32 %v127, %v214
    %v825 = vld [vmem:[%s4 + $0x6] sm:$0x1]
    %v826 = vlaneseq
    %v827 = vshrl.u32 %v826, 7
    %v828 = vsub.s32 0, %v827
    %v829 = vrot.slane %v825, %v828
    %v830 = vmul.f32 %v824, %v829
    %v831 = vsel %vm409, %v830, 0.0
    %832 = vadd.xlane.f32.xlu0 %v831
    %v833 = vpop.xlane.xlu0 %832
    %v834 = vadd.f32 %v823, %v833
    %v835 = vld [vmem:[%s4 + $0x7] sm:$0x1]
    %v836 = vlaneseq
    %v837 = vshrl.u32 %v836, 7
    %v838 = vsub.s32 0, %v837
    %v839 = vrot.slane %v835, %v838
    %v840 = vadd.f32 %v834, %v839
    %v841 = vxor.u32 %v840, 2147483648
    %v842 = vmul.f32 %v841, 1.442695
    %v843 = vpow.pop %v842
    %v844 = vadd.f32 %v843, 1.0
    %v845 = vrcp.pop %v844
    %v846 = vmul.f32 1.0, %v845
    %vm847 = vcmask 7168
    %848 = vst.msk [vmem:[%s5] sm:$0xff] %vm847, %v846
    // Predicated region
    $region26: #{tpu_custom_call.1} parent=1 // pred_check
      _
    $region27: #{tpu_custom_call.1} parent=1 // pred_check_branch
      %850 = sbr.rel (0) target = $region29
    $region28: #{tpu_custom_call.1} parent=1 // pred_region
      _
    $region29: #{tpu_custom_call.1} parent=1 // pred_fallthru
      _
    // Predicated region
    $region30: #{tpu_custom_call.1} parent=1 // pred_check
      _
    $region31: #{tpu_custom_call.1} parent=1 // pred_check_branch
      %852 = sbr.rel (0) target = $region33
    $region32: #{tpu_custom_call.1} parent=1 // pred_region
      _
    $region33: #{tpu_custom_call.1} parent=1 // pred_fallthru
      _
    %853 = vsyncpa [#allocation3], 1

</llo_original>
